<compile_context>
chip_gen: v7x
topology: tpu7x:2x2x1
jax: 0.10.0
libtpu: 0.0.40
codegen_flags: <defaults>
</compile_context>

<pallas_src>
import jax
import jax.numpy as jnp
from jax.experimental import pallas as pl
from jax.experimental.pallas import tpu as pltpu

LN_EPS = 1e-5


def _round_up(n, m):
    return ((n + m - 1) // m) * m


def dense_layer_kernel(x_ref, w_ref, b_ref, gamma_ref, beta_ref, out_ref):
    """One batch-tile of the DenseLayer forward pass.

    x_ref:     (TB, C)      input tile
    w_ref:     (C, G)       fc weight (transposed vs. torch layout), resident
    b_ref:     (1, G)       fc bias
    gamma_ref: (1, C)       LayerNorm scale
    beta_ref:  (1, C)       LayerNorm shift
    out_ref:   (TB, C + G)  concat([x, relu(fc(relu(ln(x))))], axis=-1)
    """
    x = x_ref[...]
    xf = x.astype(jnp.float32)

    # LayerNorm over last axis (biased variance, f32 stats -- matches torch).
    mean = jnp.mean(xf, axis=-1, keepdims=True)
    centered = xf - mean
    var = jnp.mean(centered * centered, axis=-1, keepdims=True)
    xn = centered * jax.lax.rsqrt(var + LN_EPS)
    xn = xn * gamma_ref[...].astype(jnp.float32) + beta_ref[...].astype(jnp.float32)

    # ReLU -> Linear (MXU, native-dtype operands, f32 accumulate) -> ReLU.
    h = jnp.maximum(xn, 0.0).astype(w_ref.dtype)
    y = jnp.dot(h, w_ref[...], preferred_element_type=jnp.float32)
    y = y + b_ref[...].astype(jnp.float32)
    y = jnp.maximum(y, 0.0)

    # Single full-tile store (one store stream; concat in registers).
    out_ref[...] = jnp.concatenate(
        [x.astype(out_ref.dtype), y.astype(out_ref.dtype)], axis=-1)


def dense_layer_forward(x, w, b, gamma, beta, *, tile_b=8192):
    """x: (B, C); w: (C, G); b: (G,); gamma/beta: (C,). Returns (B, C+G)."""
    B, C = x.shape
    G = w.shape[1]
    itemsize = jnp.dtype(x.dtype).itemsize

    # dtype-aware sublane alignment: 8 rows (f32), 16 (bf16), 32 (int8/fp8).
    align = max(8, 32 // itemsize)

    # Large batch tile (amortize ~0.35 us per-grid-step overhead), aligned, and
    # capped near ceil(B/2) so the grid has >= 2 steps whenever B allows it
    # (v7x megacore: 2 TensorCores share the "parallel" grid axis).
    tb_req = _round_up(max(int(tile_b), align), align)
    tb_cap = _round_up(max(pl.cdiv(B, 2), 1), align)
    tb = min(tb_req, tb_cap)
    num_steps = pl.cdiv(B, tb)   # ragged last block handled by Pallas masking

    b2 = b.reshape(1, G)
    gamma2 = gamma.reshape(1, C)
    beta2 = beta.reshape(1, C)

    param_bytes = (C * G) * jnp.dtype(w.dtype).itemsize + (3 * C + G) * 4
    # Double-buffered x and out tiles + resident params.
    working = 2 * tb * (C + (C + G)) * itemsize + param_bytes

    # Per-generation VMEM cap with headroom for compiler-internal scratch.
    try:
        vmem_cap = int(pltpu.get_tpu_info().vmem_capacity_bytes)
    except Exception:
        vmem_cap = 64 * 1024 * 1024  # conservative (v7x per-TC physical)
    vmem_cap = int(vmem_cap * 0.85)
    vmem_limit = int(min(vmem_cap, max(2 * working, 16 * 1024 * 1024)))

    cost = pl.CostEstimate(
        flops=2 * B * C * G + 8 * B * C,
        transcendentals=B,  # one rsqrt per row
        bytes_accessed=(B * C + B * (C + G)) * itemsize + param_bytes,
    )

    out = pl.pallas_call(
        dense_layer_kernel,
        out_shape=jax.ShapeDtypeStruct((B, C + G), x.dtype),
        grid_spec=pltpu.PrefetchScalarGridSpec(
            num_scalar_prefetch=0,
            grid=(num_steps,),
            in_specs=[
                pl.BlockSpec((tb, C), lambda i: (i, 0)),   # x tile
                pl.BlockSpec((C, G), lambda i: (0, 0)),    # weight (resident)
                pl.BlockSpec((1, G), lambda i: (0, 0)),    # bias
                pl.BlockSpec((1, C), lambda i: (0, 0)),    # ln gamma
                pl.BlockSpec((1, C), lambda i: (0, 0)),    # ln beta
            ],
            out_specs=pl.BlockSpec((tb, C + G), lambda i: (i, 0)),
        ),
        compiler_params=pltpu.CompilerParams(
            dimension_semantics=("parallel",),
            vmem_limit_bytes=vmem_limit,
        ),
        cost_estimate=cost,
    )(x, w, b2, gamma2, beta2)
    return out


def reference_forward(x, w, b, gamma, beta):
    """Pure-JAX reference matching torch eval semantics."""
    xf = x.astype(jnp.float32)
    mean = jnp.mean(xf, axis=-1, keepdims=True)
    var = jnp.mean((xf - mean) ** 2, axis=-1, keepdims=True)
    xn = (xf - mean) / jnp.sqrt(var + LN_EPS) * gamma + beta
    h = jnp.maximum(xn, 0.0)
    y = jnp.maximum(h @ w + b, 0.0)
    return jnp.concatenate([x, y.astype(x.dtype)], axis=1)


if __name__ == "__main__":
    # Small shapes consistent with the module; B=100 exercises the ragged-tail
    # (non-divisible grid) path and the >=2-step grid split.
    B, C_IN, GROWTH = 100, 32, 16

    key = jax.random.PRNGKey(0)
    kx, kw, kb = jax.random.split(key, 3)

    x = jax.random.normal(kx, (B, C_IN), dtype=jnp.float32)
    # torch Linear weight is (growth_rate, in_channels); we store its transpose (C, G).
    w = (jax.random.uniform(kw, (C_IN, GROWTH), dtype=jnp.float32,
                            minval=-1.0, maxval=1.0) / jnp.sqrt(C_IN))
    b = (jax.random.uniform(kb, (GROWTH,), dtype=jnp.float32,
                            minval=-1.0, maxval=1.0) / jnp.sqrt(C_IN))
    gamma = jnp.ones((C_IN,), dtype=jnp.float32)   # nn.LayerNorm default init
    beta = jnp.zeros((C_IN,), dtype=jnp.float32)

    out = dense_layer_forward(x, w, b, gamma, beta)
    out = jax.block_until_ready(out)

    ref = reference_forward(x, w, b, gamma, beta)
    assert out.shape == (B, C_IN + GROWTH)
    assert jnp.allclose(out, ref, atol=1e-5, rtol=1e-5), "mismatch vs reference"

    print("KERNEL_OK")
</pallas_src>

<mosaic_0001>
module attributes {stable_mosaic.version = 11 : i64} {
  func.func @dense_layer_kernel(%arg0: i32, %arg1: memref<56x32xf32, #tpu.memory_space<vmem>>, %arg2: memref<32x16xf32, #tpu.memory_space<vmem>>, %arg3: memref<1x16xf32, #tpu.memory_space<vmem>>, %arg4: memref<1x32xf32, #tpu.memory_space<vmem>>, %arg5: memref<1x32xf32, #tpu.memory_space<vmem>>, %arg6: memref<56x48xf32, #tpu.memory_space<vmem>>) attributes {dimension_semantics = [#tpu.dimension_semantics<parallel>], iteration_bounds = array<i64: 2>, scalar_prefetch = 0 : i64, scratch_operands = 0 : i64, tpu.core_type = #tpu.core_type<tc>, window_params = [{transform_indices = @transform_0, window_bounds = array<i64: 56, 32>}, {pipeline_mode = #tpu.pipeline_mode<synchronous>, transform_indices = @transform_1, window_bounds = array<i64: 32, 16>}, {pipeline_mode = #tpu.pipeline_mode<synchronous>, transform_indices = @transform_2, window_bounds = array<i64: 1, 16>}, {pipeline_mode = #tpu.pipeline_mode<synchronous>, transform_indices = @transform_3, window_bounds = array<i64: 1, 32>}, {pipeline_mode = #tpu.pipeline_mode<synchronous>, transform_indices = @transform_4, window_bounds = array<i64: 1, 32>}, {transform_indices = @transform_5, window_bounds = array<i64: 56, 48>}]} {
    %c0 = arith.constant 0 : index
    %c0_0 = arith.constant 0 : index
    %0 = vector.load %arg1[%c0, %c0_0] : memref<56x32xf32, #tpu.memory_space<vmem>>, vector<56x32xf32>
    %cst = arith.constant dense<0.000000e+00> : vector<56xf32>
    %1 = vector.multi_reduction <add>, %0, %cst [1] : vector<56x32xf32> to vector<56xf32>
    %2 = vector.shape_cast %1 : vector<56xf32> to vector<56x1xf32>
    %cst_1 = arith.constant 3.200000e+01 : f32
    %3 = vector.broadcast %cst_1 : f32 to vector<56x1xf32>
    %4 = arith.divf %2, %3 : vector<56x1xf32>
    %5 = vector.broadcast %4 : vector<56x1xf32> to vector<56x32xf32>
    %6 = arith.subf %0, %5 : vector<56x32xf32>
    %7 = arith.mulf %6, %6 : vector<56x32xf32>
    %cst_2 = arith.constant dense<0.000000e+00> : vector<56xf32>
    %8 = vector.multi_reduction <add>, %7, %cst_2 [1] : vector<56x32xf32> to vector<56xf32>
    %9 = vector.shape_cast %8 : vector<56xf32> to vector<56x1xf32>
    %cst_3 = arith.constant 3.200000e+01 : f32
    %10 = vector.broadcast %cst_3 : f32 to vector<56x1xf32>
    %11 = arith.divf %9, %10 : vector<56x1xf32>
    %cst_4 = arith.constant 9.99999974E-6 : f32
    %12 = vector.broadcast %cst_4 : f32 to vector<56x1xf32>
    %13 = arith.addf %11, %12 : vector<56x1xf32>
    %14 = math.rsqrt %13 : vector<56x1xf32>
    %15 = vector.broadcast %14 : vector<56x1xf32> to vector<56x32xf32>
    %16 = arith.mulf %6, %15 : vector<56x32xf32>
    %c0_5 = arith.constant 0 : index
    %c0_6 = arith.constant 0 : index
    %17 = vector.load %arg4[%c0_5, %c0_6] : memref<1x32xf32, #tpu.memory_space<vmem>>, vector<1x32xf32>
    %18 = vector.broadcast %17 : vector<1x32xf32> to vector<56x32xf32>
    %19 = arith.mulf %16, %18 : vector<56x32xf32>
    %c0_7 = arith.constant 0 : index
    %c0_8 = arith.constant 0 : index
    %20 = vector.load %arg5[%c0_7, %c0_8] : memref<1x32xf32, #tpu.memory_space<vmem>>, vector<1x32xf32>
    %21 = vector.broadcast %20 : vector<1x32xf32> to vector<56x32xf32>
    %22 = arith.addf %19, %21 : vector<56x32xf32>
    %cst_9 = arith.constant 0.000000e+00 : f32
    %23 = vector.broadcast %cst_9 : f32 to vector<56x32xf32>
    %24 = arith.maximumf %22, %23 : vector<56x32xf32>
    %c0_10 = arith.constant 0 : index
    %c0_11 = arith.constant 0 : index
    %25 = vector.load %arg2[%c0_10, %c0_11] : memref<32x16xf32, #tpu.memory_space<vmem>>, vector<32x16xf32>
    %cst_12 = arith.constant dense<0.000000e+00> : vector<56x16xf32>
    %26 = tpu.matmul %24, %25, %cst_12 {dimension_numbers = #tpu.dot_dimension_numbers<[1], [0], [0], [1], [0, 0, 1, 1], [], []>} : vector<56x32xf32>, vector<32x16xf32>, vector<56x16xf32> -> vector<56x16xf32>
    %c0_13 = arith.constant 0 : index
    %c0_14 = arith.constant 0 : index
    %27 = vector.load %arg3[%c0_13, %c0_14] : memref<1x16xf32, #tpu.memory_space<vmem>>, vector<1x16xf32>
    %28 = vector.broadcast %27 : vector<1x16xf32> to vector<56x16xf32>
    %29 = arith.addf %26, %28 : vector<56x16xf32>
    %cst_15 = arith.constant 0.000000e+00 : f32
    %30 = vector.broadcast %cst_15 : f32 to vector<56x16xf32>
    %31 = arith.maximumf %29, %30 : vector<56x16xf32>
    %32 = tpu.concatenate %0, %31 in 1 : vector<56x32xf32>, vector<56x16xf32> -> vector<56x48xf32>
    %c0_16 = arith.constant 0 : index
    %c0_17 = arith.constant 0 : index
    %33 = vector.load %arg6[%c0_16, %c0_17] : memref<56x48xf32, #tpu.memory_space<vmem>>, vector<56x48xf32>
    tpu.vector_store %arg6[%c0_16, %c0_17], %32 {strides = array<i32>} : memref<56x48xf32, #tpu.memory_space<vmem>>, vector<56x48xf32>,
    return
  }
  func.func @transform_0(%arg0: i32) -> (i32, i32) {
    %c0_i32 = arith.constant 0 : i32
    %c0_i32_0 = arith.constant 0 : i32
    return %arg0, %c0_i32 : i32, i32
  }
  func.func @transform_1(%arg0: i32) -> (i32, i32) {
    %c0_i32 = arith.constant 0 : i32
    %c0_i32_0 = arith.constant 0 : i32
    %c0_i32_1 = arith.constant 0 : i32
    return %c0_i32, %c0_i32_0 : i32, i32
  }
  func.func @transform_2(%arg0: i32) -> (i32, i32) {
    %c0_i32 = arith.constant 0 : i32
    %c0_i32_0 = arith.constant 0 : i32
    %c0_i32_1 = arith.constant 0 : i32
    return %c0_i32, %c0_i32_0 : i32, i32
  }
  func.func @transform_3(%arg0: i32) -> (i32, i32) {
    %c0_i32 = arith.constant 0 : i32
    %c0_i32_0 = arith.constant 0 : i32
    %c0_i32_1 = arith.constant 0 : i32
    return %c0_i32, %c0_i32_0 : i32, i32
  }
  func.func @transform_4(%arg0: i32) -> (i32, i32) {
    %c0_i32 = arith.constant 0 : i32
    %c0_i32_0 = arith.constant 0 : i32
    %c0_i32_1 = arith.constant 0 : i32
    return %c0_i32, %c0_i32_0 : i32, i32
  }
  func.func @transform_5(%arg0: i32) -> (i32, i32) {
    %c0_i32 = arith.constant 0 : i32
    %c0_i32_0 = arith.constant 0 : i32
    return %arg0, %c0_i32 : i32, i32
  }
}

</mosaic_0001>

<llo_original>
// kernel: tpu_custom_call.1
$region0: #{tpu_custom_call.1}
  #allocation0 [shape = 'u32[]', space=smem, size = 0x4, offset = 0x4, fixed_abs, tag = 'smem constant byte address 0x4 - core index']
  #allocation1 [shape = 'u32[144,128]{1,0:T(1,128)}', space=vmem, size = 0x12000, scoped, tag = 'internal scratch']
  %s0 = inlined_call_operand.vmem [shape: f32[100,32], index: 0, kind: input, shape index: {}]
  %s1 = inlined_call_operand.vmem [shape: f32[32,16], index: 1, kind: input, shape index: {}]
  %s2 = inlined_call_operand.vmem [shape: f32[1,16], index: 2, kind: input, shape index: {}]
  %s3 = inlined_call_operand.vmem [shape: f32[1,32], index: 3, kind: input, shape index: {}]
  %s4 = inlined_call_operand.vmem [shape: f32[1,32], index: 4, kind: input, shape index: {}]
  %s5 = inlined_call_operand.vmem [shape: f32[100,48], index: 5, kind: output, shape index: {}]
  %s6 = sld [smem:[#allocation0]]
  $region101: #{tpu_custom_call.1} parent=0
    _
  %s8 = ssub.s32 1, %s6
  %s9 = scalar_select 0, %s8, %s6
  $region1: #{tpu_custom_call.1} parent=0
    #allocation2 [shape = 'u8[57344]{0}', space=vmem, size = 0xe000, scoped, tag = 'output window, operand 0']
    loop: start=0, step=1, limit=4
    $region2: #{tpu_custom_call.1} parent=1 // loop_pre_header
      _
    $region3: #{tpu_custom_call.1} parent=1 // loop_header
      %s11 = sphi 0, %s15
      %p12 = scmp.ge.s32.totalorder %s11, 4
      %s21 = sphi 0, %s23
      %s24 = sphi 0, %s21
      %s25 = sphi 0, %s24
      %s41 = sphi 0, %s25
      %s45 = sphi 0, %s45
      %s47 = sphi 0, %s45
      %s48 = sphi 0, %s47
      %s62 = sphi 0, %s48
      %s66 = sphi 0, %s66
      %s68 = sphi 0, %s66
      %s69 = sphi 0, %s68
      %s83 = sphi 0, %s69
      %s87 = sphi 0, %s87
      %s89 = sphi 0, %s87
      %s90 = sphi 0, %s89
      %s104 = sphi 0, %s90
      %s108 = sphi 0, %s108
      %s110 = sphi 0, %s108
      %s111 = sphi 0, %s110
      %s125 = sphi 0, %s111
      %s131 = sphi 0, %s133
      %s134 = sphi 0, %s131
      %s135 = sphi 0, %s134
      %s151 = sphi 0, %s135
    $region4: #{tpu_custom_call.1} parent=1 // loop_header_branch
      %14 = sbr.rel (%p12) target = $region8
    $region5: #{tpu_custom_call.1} parent=1 // loop_body
      %s16 = ssub.s32 %s11, 1
      %s17 = ssub.s32 %s11, 2
      %s18 = sadd.s32 %s11, 1
      %s19 = ssub.s32 %s11, %s18
      %p20 = scmp.eq.s32.totalorder %s19, 0
      %s22 = sadd.s32 %s21, 1
      %s23 = scalar_select %p20, %s21, %s22
      %p26 = pneg %p20
      %p27 = scmp.eq.s32.totalorder %s11, 1
      %p28 = por %p26, %p27
      %p29 = scmp.ne.s32.totalorder %s21, %s24
      %p30 = scmp.eq.s32.totalorder %s11, 0
      %p31 = por %p29, %p30
      %p32 = scmp.ne.s32.totalorder %s21, %s24
      %p33 = scmp.eq.s32.totalorder %s16, 1
      %p34 = por %p32, %p33
      %p35 = scmp.ne.s32.totalorder %s24, %s25
      %p36 = scmp.eq.s32.totalorder %s16, 0
      %p37 = por %p35, %p36
      %p38 = scmp.ne.s32.totalorder %s24, %s25
      %p39 = scmp.eq.s32.totalorder %s17, 1
      %p40 = por %p38, %p39
      %p42 = scmp.ne.s32.totalorder %s25, %s41
      %p43 = scmp.eq.s32.totalorder %s17, 0
      %p44 = por %p42, %p43
      %s46 = sadd.s32 %s45, 1
      %p49 = scmp.eq.s32.totalorder %s11, 1
      %p50 = scmp.ne.s32.totalorder %s45, %s47
      %p51 = scmp.eq.s32.totalorder %s11, 0
      %p52 = por %p50, %p51
      %p53 = scmp.ne.s32.totalorder %s45, %s47
      %p54 = scmp.eq.s32.totalorder %s16, 1
      %p55 = por %p53, %p54
      %p56 = scmp.ne.s32.totalorder %s47, %s48
      %p57 = scmp.eq.s32.totalorder %s16, 0
      %p58 = por %p56, %p57
      %p59 = scmp.ne.s32.totalorder %s47, %s48
      %p60 = scmp.eq.s32.totalorder %s17, 1
      %p61 = por %p59, %p60
      %p63 = scmp.ne.s32.totalorder %s48, %s62
      %p64 = scmp.eq.s32.totalorder %s17, 0
      %p65 = por %p63, %p64
      %s67 = sadd.s32 %s66, 1
      %p70 = scmp.eq.s32.totalorder %s11, 1
      %p71 = scmp.ne.s32.totalorder %s66, %s68
      %p72 = scmp.eq.s32.totalorder %s11, 0
      %p73 = por %p71, %p72
      %p74 = scmp.ne.s32.totalorder %s66, %s68
      %p75 = scmp.eq.s32.totalorder %s16, 1
      %p76 = por %p74, %p75
      %p77 = scmp.ne.s32.totalorder %s68, %s69
      %p78 = scmp.eq.s32.totalorder %s16, 0
      %p79 = por %p77, %p78
      %p80 = scmp.ne.s32.totalorder %s68, %s69
      %p81 = scmp.eq.s32.totalorder %s17, 1
      %p82 = por %p80, %p81
      %p84 = scmp.ne.s32.totalorder %s69, %s83
      %p85 = scmp.eq.s32.totalorder %s17, 0
      %p86 = por %p84, %p85
      %s88 = sadd.s32 %s87, 1
      %p91 = scmp.eq.s32.totalorder %s11, 1
      %p92 = scmp.ne.s32.totalorder %s87, %s89
      %p93 = scmp.eq.s32.totalorder %s11, 0
      %p94 = por %p92, %p93
      %p95 = scmp.ne.s32.totalorder %s87, %s89
      %p96 = scmp.eq.s32.totalorder %s16, 1
      %p97 = por %p95, %p96
      %p98 = scmp.ne.s32.totalorder %s89, %s90
      %p99 = scmp.eq.s32.totalorder %s16, 0
      %p100 = por %p98, %p99
      %p101 = scmp.ne.s32.totalorder %s89, %s90
      %p102 = scmp.eq.s32.totalorder %s17, 1
      %p103 = por %p101, %p102
      %p105 = scmp.ne.s32.totalorder %s90, %s104
      %p106 = scmp.eq.s32.totalorder %s17, 0
      %p107 = por %p105, %p106
      %s109 = sadd.s32 %s108, 1
      %p112 = scmp.eq.s32.totalorder %s11, 1
      %p113 = scmp.ne.s32.totalorder %s108, %s110
      %p114 = scmp.eq.s32.totalorder %s11, 0
      %p115 = por %p113, %p114
      %p116 = scmp.ne.s32.totalorder %s108, %s110
      %p117 = scmp.eq.s32.totalorder %s16, 1
      %p118 = por %p116, %p117
      %p119 = scmp.ne.s32.totalorder %s110, %s111
      %p120 = scmp.eq.s32.totalorder %s16, 0
      %p121 = por %p119, %p120
      %p122 = scmp.ne.s32.totalorder %s110, %s111
      %p123 = scmp.eq.s32.totalorder %s17, 1
      %p124 = por %p122, %p123
      %p126 = scmp.ne.s32.totalorder %s111, %s125
      %p127 = scmp.eq.s32.totalorder %s17, 0
      %p128 = por %p126, %p127
      %s129 = ssub.s32 %s11, %s18
      %p130 = scmp.eq.s32.totalorder %s129, 0
      %s132 = sadd.s32 %s131, 1
      %s133 = scalar_select %p130, %s131, %s132
      %p136 = pneg %p130
      %p137 = scmp.eq.s32.totalorder %s11, 1
      %p138 = por %p136, %p137
      %p139 = scmp.ne.s32.totalorder %s131, %s134
      %p140 = scmp.eq.s32.totalorder %s11, 0
      %p141 = por %p139, %p140
      %p142 = scmp.ne.s32.totalorder %s131, %s134
      %p143 = scmp.eq.s32.totalorder %s16, 1
      %p144 = por %p142, %p143
      %p145 = scmp.ne.s32.totalorder %s134, %s135
      %p146 = scmp.eq.s32.totalorder %s16, 0
      %p147 = por %p145, %p146
      %p148 = scmp.ne.s32.totalorder %s134, %s135
      %p149 = scmp.eq.s32.totalorder %s17, 1
      %p150 = por %p148, %p149
      %p152 = scmp.ne.s32.totalorder %s135, %s151
      %p153 = scmp.eq.s32.totalorder %s17, 0
      %p154 = por %p152, %p153
      %p155 = scmp.le.s32.totalorder 1, %s11
      %p156 = scmp.lt.s32.totalorder %s11, 3
      %p157 = pnand %p155, %p156
      %p158 = pneg %p157
      // Predicated region
      $region9: #{tpu_custom_call.1} parent=5 // pred_check
        _
      $region10: #{tpu_custom_call.1} parent=5 // pred_check_branch
        %160 = sbr.rel (%p157) target = $region12
      $region11: #{tpu_custom_call.1} parent=5 // pred_region
        %s161 = ssub.s32 %s11, 1
        // Predicated region
        $region13: #{tpu_custom_call.1} parent=11 // pred_check
          %p162 = pneg %p58
        $region14: #{tpu_custom_call.1} parent=11 // pred_check_branch
          %164 = sbr.rel (%p162) target = $region16
        $region15: #{tpu_custom_call.1} parent=11 // pred_region
          _
        $region16: #{tpu_custom_call.1} parent=11 // pred_fallthru
          _
        // Predicated region
        $region17: #{tpu_custom_call.1} parent=11 // pred_check
          %p165 = pneg %p79
        $region18: #{tpu_custom_call.1} parent=11 // pred_check_branch
          %167 = sbr.rel (%p165) target = $region20
        $region19: #{tpu_custom_call.1} parent=11 // pred_region
          _
        $region20: #{tpu_custom_call.1} parent=11 // pred_fallthru
          _
        // Predicated region
        $region21: #{tpu_custom_call.1} parent=11 // pred_check
          %p168 = pneg %p100
        $region22: #{tpu_custom_call.1} parent=11 // pred_check_branch
          %170 = sbr.rel (%p168) target = $region24
        $region23: #{tpu_custom_call.1} parent=11 // pred_region
          _
        $region24: #{tpu_custom_call.1} parent=11 // pred_fallthru
          _
        // Predicated region
        $region25: #{tpu_custom_call.1} parent=11 // pred_check
          %p171 = pneg %p121
        $region26: #{tpu_custom_call.1} parent=11 // pred_check_branch
          %173 = sbr.rel (%p171) target = $region28
        $region27: #{tpu_custom_call.1} parent=11 // pred_region
          _
        $region28: #{tpu_custom_call.1} parent=11 // pred_fallthru
          _
      $region12: #{tpu_custom_call.1} parent=5 // pred_fallthru
        _
      %p174 = scmp.lt.s32.totalorder %s11, 2
      // Predicated region
      $region29: #{tpu_custom_call.1} parent=5 // pred_check
        %p175 = pneg %p174
      $region30: #{tpu_custom_call.1} parent=5 // pred_check_branch
        %177 = sbr.rel (%p175) target = $region32
      $region31: #{tpu_custom_call.1} parent=5 // pred_region
        // Predicated region
        $region33: #{tpu_custom_call.1} parent=31 // pred_check
          %p178 = pneg %p31
        $region34: #{tpu_custom_call.1} parent=31 // pred_check_branch
          %180 = sbr.rel (%p178) target = $region36
        $region35: #{tpu_custom_call.1} parent=31 // pred_region
          %s181 = smul.u32 7, %s11
          %s182 = ssub.s32 13, %s181
          %p183 = scmp.lt.s32.totalorder %s182, 7
          %s184 = scalar_select %p183, %s182, 7
          %s185 = smul.u32 128, %s184
          %p186 = scmp.lt.s32.totalorder %s181, 12
          %s187 = scalar_select %p186, %s181, 12
          %s188 = smul.addr %s187, 8
          %s189 = scalar_lea.vmem %s0, %s188
          %s190 = smul.u32 7, %s11
          %s191 = ssub.s32 13, %s190
          %p192 = scmp.lt.s32.totalorder %s191, 7
          %s193 = scalar_select %p192, %s191, 7
          %s194 = smul.u32 128, %s193
        $region36: #{tpu_custom_call.1} parent=31 // pred_fallthru
          _
      $region32: #{tpu_custom_call.1} parent=5 // pred_fallthru
        _
      %p195 = scmp.le.s32.totalorder 1, %s11
      %p196 = scmp.lt.s32.totalorder %s11, 3
      %p197 = pnand %p195, %p196
      %p198 = pneg %p197
      // Predicated region
      $region37: #{tpu_custom_call.1} parent=5 // pred_check
        _
      $region38: #{tpu_custom_call.1} parent=5 // pred_check_branch
        %200 = sbr.rel (%p197) target = $region40
      $region39: #{tpu_custom_call.1} parent=5 // pred_region
        %s201 = ssub.s32 %s11, 1
        %s202 = smul.u32 7, %s16
        %s203 = ssub.s32 13, %s202
        %p204 = scmp.lt.s32.totalorder %s203, 7
        %s205 = scalar_select %p204, %s203, 7
        %s206 = smul.u32 128, %s205
        %p207 = scmp.lt.s32.totalorder %s202, 12
        %s208 = scalar_select %p207, %s202, 12
        %s209 = smul.addr %s208, 8
        %s210 = scalar_lea.vmem %s0, %s209
        %p211 = pneg %p37
        %p212 = pneg %p34
        %p213 = pneg %p58
        %p214 = pneg %p55
        %p215 = pneg %p79
        %p216 = pneg %p76
        %p217 = pneg %p100
        %p218 = pneg %p97
        %p219 = pneg %p121
        %p220 = pneg %p118
        %p221 = pneg %p147
        %p222 = pneg %p144
        %s223 = sand.u32 %s134, 1
        %s224 = sand.u32 %s134, 1
        %s225 = smul.addr %s224, 56
        %s226 = scalar_lea.vmem [#allocation2], %s225
        %s227 = smul.u32 7, %s16
        %s228 = ssub.s32 13, %s227
        %p229 = scmp.lt.s32.totalorder %s228, 7
        %s230 = scalar_select %p229, %s228, 7
        %s231 = smul.u32 128, %s230
        %p232 = scmp.lt.s32.totalorder %s227, 12
        %s233 = scalar_select %p232, %s227, 12
        %s234 = smul.addr %s233, 8
        %s235 = scalar_lea.vmem %s0, %s234
        %s236 = smul.u32 7, %s16
        %s237 = ssub.s32 13, %s236
        %p238 = scmp.lt.s32.totalorder %s237, 7
        %s239 = scalar_select %p238, %s237, 7
        %s240 = smul.u32 128, %s239
        %s241 = smul.u32 7, %s16
        %s242 = ssub.s32 13, %s241
        %p243 = scmp.lt.s32.totalorder %s242, 7
        %s244 = scalar_select %p243, %s242, 7
        %s245 = smul.u32 128, %s244
        %v246 = vld [vmem:[%s235] sm:$0xff]
        %v247 = vld [vmem:[%s235 + $0x8] sm:$0xff]
        %v248 = vld [vmem:[%s235 + $0x10] sm:$0xff]
        %v249 = vld [vmem:[%s235 + $0x18] sm:$0xff]
        %v250 = vld [vmem:[%s235 + $0x20] sm:$0xff]
        %v251 = vld [vmem:[%s235 + $0x28] sm:$0xff]
        %v252 = vld [vmem:[%s235 + $0x30] sm:$0xff]
        %vm253 = vcmask 261120
        %v254 = vsel %vm253, %v246, 0.0
        %255 = vadd.xlane.f32.xlu0 %v254
        %v256 = vpop.xlane.xlu0 %255
        %v257 = vsel %vm253, %v247, 0.0
        %258 = vadd.xlane.f32.xlu0 %v257
        %v259 = vpop.xlane.xlu0 %258
        %v260 = vsel %vm253, %v248, 0.0
        %261 = vadd.xlane.f32.xlu0 %v260
        %v262 = vpop.xlane.xlu0 %261
        %v263 = vsel %vm253, %v249, 0.0
        %264 = vadd.xlane.f32.xlu0 %v263
        %v265 = vpop.xlane.xlu0 %264
        %v266 = vsel %vm253, %v250, 0.0
        %267 = vadd.xlane.f32.xlu0 %v266
        %v268 = vpop.xlane.xlu0 %267
        %v269 = vsel %vm253, %v251, 0.0
        %270 = vadd.xlane.f32.xlu0 %v269
        %v271 = vpop.xlane.xlu0 %270
        %v272 = vsel %vm253, %v252, 0.0
        %273 = vadd.xlane.f32.xlu0 %v272
        %v274 = vpop.xlane.xlu0 %273
        %v275 = vrcp.pop 32.0
        %v276 = vmul.f32 %v256, %v275
        %v277 = vmul.f32 %v259, %v275
        %v278 = vmul.f32 %v262, %v275
        %v279 = vmul.f32 %v265, %v275
        %v280 = vmul.f32 %v268, %v275
        %v281 = vmul.f32 %v271, %v275
        %v282 = vmul.f32 %v274, %v275
        %v283 = vsub.f32 %v246, %v276
        %v284 = vsub.f32 %v247, %v277
        %v285 = vsub.f32 %v248, %v278
        %v286 = vsub.f32 %v249, %v279
        %v287 = vsub.f32 %v250, %v280
        %v288 = vsub.f32 %v251, %v281
        %v289 = vsub.f32 %v252, %v282
        %v290 = vmul.f32 %v283, %v283
        %v291 = vmul.f32 %v284, %v284
        %v292 = vmul.f32 %v285, %v285
        %v293 = vmul.f32 %v286, %v286
        %v294 = vmul.f32 %v287, %v287
        %v295 = vmul.f32 %v288, %v288
        %v296 = vmul.f32 %v289, %v289
        %v297 = vsel %vm253, %v290, 0.0
        %298 = vadd.xlane.f32.xlu0 %v297
        %v299 = vpop.xlane.xlu0 %298
        %v300 = vsel %vm253, %v291, 0.0
        %301 = vadd.xlane.f32.xlu0 %v300
        %v302 = vpop.xlane.xlu0 %301
        %v303 = vsel %vm253, %v292, 0.0
        %304 = vadd.xlane.f32.xlu0 %v303
        %v305 = vpop.xlane.xlu0 %304
        %v306 = vsel %vm253, %v293, 0.0
        %307 = vadd.xlane.f32.xlu0 %v306
        %v308 = vpop.xlane.xlu0 %307
        %v309 = vsel %vm253, %v294, 0.0
        %310 = vadd.xlane.f32.xlu0 %v309
        %v311 = vpop.xlane.xlu0 %310
        %v312 = vsel %vm253, %v295, 0.0
        %313 = vadd.xlane.f32.xlu0 %v312
        %v314 = vpop.xlane.xlu0 %313
        %v315 = vsel %vm253, %v296, 0.0
        %316 = vadd.xlane.f32.xlu0 %v315
        %v317 = vpop.xlane.xlu0 %316
        %v318 = vmul.f32 %v299, %v275
        %v319 = vmul.f32 %v302, %v275
        %v320 = vmul.f32 %v305, %v275
        %v321 = vmul.f32 %v308, %v275
        %v322 = vmul.f32 %v311, %v275
        %v323 = vmul.f32 %v314, %v275
        %v324 = vmul.f32 %v317, %v275
        %v325 = vadd.f32 %v318, 1e-05
        %v326 = vadd.f32 %v319, 1e-05
        %v327 = vadd.f32 %v320, 1e-05
        %v328 = vadd.f32 %v321, 1e-05
        %v329 = vadd.f32 %v322, 1e-05
        %v330 = vadd.f32 %v323, 1e-05
        %v331 = vadd.f32 %v324, 1e-05
        %v332 = vrsqrt.pop %v325
        %v333 = vrsqrt.pop %v326
        %v334 = vrsqrt.pop %v327
        %v335 = vrsqrt.pop %v328
        %v336 = vrsqrt.pop %v329
        %v337 = vrsqrt.pop %v330
        %v338 = vrsqrt.pop %v331
        %v339 = vmul.f32 %v283, %v332
        %v340 = vmul.f32 %v284, %v333
        %v341 = vmul.f32 %v285, %v334
        %v342 = vmul.f32 %v286, %v335
        %v343 = vmul.f32 %v287, %v336
        %v344 = vmul.f32 %v288, %v337
        %v345 = vmul.f32 %v289, %v338
        %v346 = vld [vmem:[%s3] sm:$0x1]
        %v348 = vlaneseq
        %v349 = vshrl.u32 %v348, 7
        %v350 = vsub.s32 0, %v349
        %v351 = vrot.slane %v346, %v350
        %v353 = vmul.f32 %v339, %v351
        %v354 = vmul.f32 %v340, %v351
        %v355 = vmul.f32 %v341, %v351
        %v356 = vmul.f32 %v342, %v351
        %v357 = vmul.f32 %v343, %v351
        %v358 = vmul.f32 %v344, %v351
        %v359 = vmul.f32 %v345, %v351
        %v360 = vld [vmem:[%s4] sm:$0x1]
        %v362 = vlaneseq
        %v363 = vshrl.u32 %v362, 7
        %v364 = vsub.s32 0, %v363
        %v365 = vrot.slane %v360, %v364
        %v367 = vadd.f32 %v353, %v365
        %v368 = vadd.f32 %v354, %v365
        %v369 = vadd.f32 %v355, %v365
        %v370 = vadd.f32 %v356, %v365
        %v371 = vadd.f32 %v357, %v365
        %v372 = vadd.f32 %v358, %v365
        %v373 = vadd.f32 %v359, %v365
        %v374 = vmax.f32 %v367, 0.0
        %v375 = vmax.f32 %v368, 0.0
        %v376 = vmax.f32 %v369, 0.0
        %v377 = vmax.f32 %v370, 0.0
        %v378 = vmax.f32 %v371, 0.0
        %v379 = vmax.f32 %v372, 0.0
        %v380 = vmax.f32 %v373, 0.0
        %v381 = vld [vmem:[%s1] sm:$0xff]
        %v382 = vld [vmem:[%s1 + $0x8] sm:$0xff]
        %v383 = vld [vmem:[%s1 + $0x10] sm:$0xff]
        %v384 = vld [vmem:[%s1 + $0x18] sm:$0xff]
        %v385 = vld [vmem:[%s2] sm:$0x1]
        %v387 = vlaneseq
        %v388 = vshrl.u32 %v387, 7
        %v389 = vsub.s32 0, %v388
        %v390 = vrot.slane %v385, %v389
        %v393 = vsel %vm253, %v374, 0
        %v396 = vsel %vm253, %v375, 0
        %v399 = vsel %vm253, %v376, 0
        %v402 = vsel %vm253, %v377, 0
        %v405 = vsel %vm253, %v378, 0
        %v408 = vsel %vm253, %v379, 0
        %v411 = vsel %vm253, %v380, 0
        %413 = vmatprep.subr.mxu0 0.0
        %414 = vmatpush1.msra.mxu0 %v381
        %415 = vmatprep.subr.mxu0 0.0
        %416 = vmatpush1.msra.mxu0 %v382
        %417 = vmatprep.subr.mxu0 0.0
        %418 = vmatpush1.msra.mxu0 %v383
        %419 = vmatprep.subr.mxu0 0.0
        %420 = vmatpush1.msra.mxu0 %v384
        %421 = vmatprep.subr.mxu0 0.0
        %422 = vmatpush1.msra.mxu0 0.0
        %423 = vmatprep.subr.mxu0 0.0
        %424 = vmatpush1.msra.mxu0 0.0
        %425 = vmatprep.subr.mxu0 0.0
        %426 = vmatpush1.msra.mxu0 0.0
        %427 = vmatprep.subr.mxu0 0.0
        %428 = vmatpush1.msra.mxu0 0.0
        %429 = vmatprep.subr.mxu0 0.0
        %430 = vmatpush1.msra.mxu0 0.0
        %431 = vmatprep.subr.mxu0 0.0
        %432 = vmatpush1.msra.mxu0 0.0
        %433 = vmatprep.subr.mxu0 0.0
        %434 = vmatpush1.msra.mxu0 0.0
        %435 = vmatprep.subr.mxu0 0.0
        %436 = vmatpush1.msra.mxu0 0.0
        %437 = vmatprep.subr.mxu0 0.0
        %438 = vmatpush1.msra.mxu0 0.0
        %439 = vmatprep.subr.mxu0 0.0
        %440 = vmatpush1.msra.mxu0 0.0
        %441 = vmatprep.subr.mxu0 0.0
        %442 = vmatpush1.msra.mxu0 0.0
        %443 = vmatprep.subr.mxu0 0.0
        %444 = vmatpush1.msra.mxu0 0.0
        %445 = vmatprep.subr.mxu0 0.0
        %446 = vmatpush1.msra.mxu0 0.0
        %447 = vmatprep.subr.mxu0 0.0
        %448 = vmatpush1.msra.mxu0 0.0
        %449 = vmatprep.subr.mxu0 0.0
        %450 = vmatpush1.msra.mxu0 0.0
        %451 = vmatprep.subr.mxu0 0.0
        %452 = vmatpush1.msra.mxu0 0.0
        %453 = vmatprep.subr.mxu0 0.0
        %454 = vmatpush1.msra.mxu0 0.0
        %455 = vmatprep.subr.mxu0 0.0
        %456 = vmatpush1.msra.mxu0 0.0
        %457 = vmatprep.subr.mxu0 0.0
        %458 = vmatpush1.msra.mxu0 0.0
        %459 = vmatprep.subr.mxu0 0.0
        %460 = vmatpush1.msra.mxu0 0.0
        %461 = vmatprep.subr.mxu0 0.0
        %462 = vmatpush1.msra.mxu0 0.0
        %463 = vmatprep.subr.mxu0 0.0
        %464 = vmatpush1.msra.mxu0 0.0
        %465 = vmatprep.subr.mxu0 0.0
        %466 = vmatpush1.msra.mxu0 0.0
        %467 = vmatprep.subr.mxu0 0.0
        %468 = vmatpush1.msra.mxu0 0.0
        %469 = vmatprep.subr.mxu0 0.0
        %470 = vmatpush1.msra.mxu0 0.0
        %471 = vmatprep.subr.mxu0 0.0
        %472 = vmatpush1.msra.mxu0 0.0
        %473 = vmatprep.subr.mxu0 0.0
        %474 = vmatpush1.msra.mxu0 0.0
        %475 = vmatprep.subr.mxu0 0.0
        %476 = vmatpush1.msra.mxu0 0.0
        %477 = vmatprep.mubr.f32.mxu0 0.0
        %478 = vmatmul.mubr.f32.gmra.mrb[0].mxu0 %v393
        %v479 = vpop.f32.mrb[0].mxu0
        %v480 = vadd.f32 %v390, %v479
        %v481 = vpop.f32.mrb[0].mxu0
        %482 = vmatprep.mubr.f32.mxu0 0.0
        %483 = vmatmul.mubr.f32.gmra.mrb[0].mxu0 %v396
        %v484 = vpop.f32.mrb[0].mxu0
        %v485 = vadd.f32 %v390, %v484
        %v486 = vpop.f32.mrb[0].mxu0
        %487 = vmatprep.mubr.f32.mxu0 0.0
        %488 = vmatmul.mubr.f32.gmra.mrb[0].mxu0 %v399
        %v489 = vpop.f32.mrb[0].mxu0
        %v490 = vadd.f32 %v390, %v489
        %v491 = vpop.f32.mrb[0].mxu0
        %492 = vmatprep.mubr.f32.mxu0 0.0
        %493 = vmatmul.mubr.f32.gmra.mrb[0].mxu0 %v402
        %v494 = vpop.f32.mrb[0].mxu0
        %v495 = vadd.f32 %v390, %v494
        %v496 = vpop.f32.mrb[0].mxu0
        %497 = vmatprep.mubr.f32.mxu0 0.0
        %498 = vmatmul.mubr.f32.gmra.mrb[0].mxu0 %v405
        %v499 = vpop.f32.mrb[0].mxu0
        %v500 = vadd.f32 %v390, %v499
        %v501 = vpop.f32.mrb[0].mxu0
        %502 = vmatprep.mubr.f32.mxu0 0.0
        %503 = vmatmul.mubr.f32.gmra.mrb[0].mxu0 %v408
        %v504 = vpop.f32.mrb[0].mxu0
        %v505 = vadd.f32 %v390, %v504
        %v506 = vpop.f32.mrb[0].mxu0
        %507 = vmatprep.mubr.f32.mxu0 0.0
        %508 = vmatmul.mubr.f32.gmra.mrb[0].mxu0 %v411
        %v509 = vpop.f32.mrb[0].mxu0
        %v510 = vadd.f32 %v390, %v509
        %v511 = vpop.f32.mrb[0].mxu0
        %512 = vdwg.mxu0
        %v513 = vmax.f32 %v480, 0.0
        %v514 = vmax.f32 %v485, 0.0
        %v515 = vmax.f32 %v490, 0.0
        %v516 = vmax.f32 %v495, 0.0
        %v517 = vmax.f32 %v500, 0.0
        %v518 = vmax.f32 %v505, 0.0
        %v519 = vmax.f32 %v510, 0.0
        %527 = vrot.lane.b32.xlu0 %v513, 32
        %v528 = vpop.permute.xlu0 %527
        %529 = vrot.lane.b32.xlu0 %v514, 32
        %v530 = vpop.permute.xlu0 %529
        %531 = vrot.lane.b32.xlu0 %v515, 32
        %v532 = vpop.permute.xlu0 %531
        %533 = vrot.lane.b32.xlu0 %v516, 32
        %v534 = vpop.permute.xlu0 %533
        %535 = vrot.lane.b32.xlu0 %v517, 32
        %v536 = vpop.permute.xlu0 %535
        %537 = vrot.lane.b32.xlu0 %v518, 32
        %v538 = vpop.permute.xlu0 %537
        %539 = vrot.lane.b32.xlu0 %v519, 32
        %v540 = vpop.permute.xlu0 %539
        %v548 = vsel %vm253, %v246, %v528
        %v549 = vsel %vm253, %v247, %v530
        %v550 = vsel %vm253, %v248, %v532
        %v551 = vsel %vm253, %v249, %v534
        %v552 = vsel %vm253, %v250, %v536
        %v553 = vsel %vm253, %v251, %v538
        %v554 = vsel %vm253, %v252, %v540
        %vm555 = vcmask 392192
        %556 = vst.msk [vmem:[%s226] sm:$0xff] %vm555, %v548
        %557 = vst.msk [vmem:[%s226 + $0x8] sm:$0xff] %vm555, %v549
        %558 = vst.msk [vmem:[%s226 + $0x10] sm:$0xff] %vm555, %v550
        %559 = vst.msk [vmem:[%s226 + $0x18] sm:$0xff] %vm555, %v551
        %560 = vst.msk [vmem:[%s226 + $0x20] sm:$0xff] %vm555, %v552
        %561 = vst.msk [vmem:[%s226 + $0x28] sm:$0xff] %vm555, %v553
        %562 = vst.msk [vmem:[%s226 + $0x30] sm:$0xff] %vm555, %v554
        %s563 = sand.u32 %s134, 1
        %s564 = sand.u32 %s134, 1
        %s565 = smul.addr %s564, 56
        %s566 = scalar_lea.vmem [#allocation2], %s565
        // Predicated region
        $region41: #{tpu_custom_call.1} parent=39 // pred_check
          %p567 = pneg %p144
        $region42: #{tpu_custom_call.1} parent=39 // pred_check_branch
          %569 = sbr.rel (%p567) target = $region44
        $region43: #{tpu_custom_call.1} parent=39 // pred_region
          %s570 = smul.u32 7, %s16
          %s571 = ssub.s32 13, %s570
          %p572 = scmp.lt.s32.totalorder %s571, 7
          %s573 = scalar_select %p572, %s571, 7
          %s574 = smul.u32 128, %s573
          %p575 = scmp.ne.s32.totalorder 0, %s574
          %s576 = smul.addr %s570, 8
          %s577 = scalar_lea.vmem %s5, %s576
          // Predicated region
          $region45: #{tpu_custom_call.1} parent=43 // pred_check
            %p578 = pneg %p575
          $region46: #{tpu_custom_call.1} parent=43 // pred_check_branch
            %580 = sbr.rel (%p578) target = $region48
          $region47: #{tpu_custom_call.1} parent=43 // pred_region
            // Predicated region
            $region49: #{tpu_custom_call.1} parent=47 // pred_check
              _
            $region50: #{tpu_custom_call.1} parent=47 // pred_check_branch
              %582 = sbr.rel (0) target = $region52
            $region51: #{tpu_custom_call.1} parent=47 // pred_region
              // Predicated region
              $region71: #{tpu_custom_call.1} parent=51 // pred_check
                _
              $region72: #{tpu_custom_call.1} parent=51 // pred_check_branch
                %644 = sbr.rel (0) target = $region74
              $region73: #{tpu_custom_call.1} parent=51 // pred_region
                %s645 = sdiv.u32.pop %s573, 7
                %s646 = srem.u32.pop %s573, 7
                // While loop
                $region75: #{tpu_custom_call.1} parent=73 // loop_pre_header
                  _
                $region76: #{tpu_custom_call.1} parent=73 // loop_header
                  %s648 = sphi 0, %s650
                  %p649 = scmp.ge.s32.totalorder %s648, %s645
                  %s653 = sphi 0, %s672
                  %s654 = sphi %s566, %s675
                  %s655 = sphi %s577, %s676
                $region77: #{tpu_custom_call.1} parent=73 // loop_header_branch
                  %652 = sbr.rel (%p649) target = $region81
                $region78: #{tpu_custom_call.1} parent=73 // loop_body
                  %v656 = vld [vmem:[%s654] sm:$0xff]
                  %657 = vst [vmem:[%s655] sm:$0xff] %v656
                  %v658 = vld [vmem:[%s654 + $0x8] sm:$0xff]
                  %659 = vst [vmem:[%s655 + $0x8] sm:$0xff] %v658
                  %v660 = vld [vmem:[%s654 + $0x10] sm:$0xff]
                  %661 = vst [vmem:[%s655 + $0x10] sm:$0xff] %v660
                  %v662 = vld [vmem:[%s654 + $0x18] sm:$0xff]
                  %663 = vst [vmem:[%s655 + $0x18] sm:$0xff] %v662
                  %v664 = vld [vmem:[%s654 + $0x20] sm:$0xff]
                  %665 = vst [vmem:[%s655 + $0x20] sm:$0xff] %v664
                  %v666 = vld [vmem:[%s654 + $0x28] sm:$0xff]
                  %667 = vst [vmem:[%s655 + $0x28] sm:$0xff] %v666
                  %v668 = vld [vmem:[%s654 + $0x30] sm:$0xff]
                  %669 = vst [vmem:[%s655 + $0x30] sm:$0xff] %v668
                  %s670 = sadd.s32 1, %s653
                  %p671 = scmp.ge.s32.totalorder %s670, %s645
                  %s672 = scalar_select %p671, 0, %s670
                  %s673 = smul.u32 %s672, 56
                  %s674 = smul.u32 %s672, 56
                  %s675 = scalar_lea.vmem %s566, %s673 [#allocation2]
                  %s676 = scalar_lea.vmem %s577, %s674
                $region79: #{tpu_custom_call.1} parent=73 // loop_footer
                  %s650 = sadd.s32 %s648, 1
                $region80: #{tpu_custom_call.1} parent=73 // loop_footer_branch
                  %647 = sbr.rel target = $region76
                $region81: #{tpu_custom_call.1} parent=73 // loop_exit
                  _
                %s677 = sdiv.u32.pop %s573, 7
                %s678 = srem.u32.pop %s573, 7
                %s679 = smul.u32 %s677, 7
                %s680 = smul.u32 8, %s679
                %s681 = scalar_lea.vmem %s566, %s680 [#allocation2]
                %s682 = smul.u32 8, %s679
                %s683 = scalar_lea.vmem %s577, %s682
                // While loop
                $region82: #{tpu_custom_call.1} parent=73 // loop_pre_header
                  _
                $region83: #{tpu_custom_call.1} parent=73 // loop_header
                  %s685 = sphi 0, %s687
                  %p686 = scmp.ge.s32.totalorder %s685, %s678
                  %s690 = sphi 0, %s697
                  %s691 = sphi %s681, %s700
                  %s692 = sphi %s683, %s701
                $region84: #{tpu_custom_call.1} parent=73 // loop_header_branch
                  %689 = sbr.rel (%p686) target = $region88
                $region85: #{tpu_custom_call.1} parent=73 // loop_body
                  %v693 = vld [vmem:[%s691] sm:$0xff]
                  %694 = vst [vmem:[%s692] sm:$0xff] %v693
                  %s695 = sadd.s32 1, %s690
                  %p696 = scmp.ge.s32.totalorder %s695, %s678
                  %s697 = scalar_select %p696, 0, %s695
                  %s698 = smul.u32 %s697, 8
                  %s699 = smul.u32 %s697, 8
                  %s700 = scalar_lea.vmem %s681, %s698 [#allocation2]
                  %s701 = scalar_lea.vmem %s683, %s699
                $region86: #{tpu_custom_call.1} parent=73 // loop_footer
                  %s687 = sadd.s32 %s685, 1
                $region87: #{tpu_custom_call.1} parent=73 // loop_footer_branch
                  %684 = sbr.rel target = $region83
                $region88: #{tpu_custom_call.1} parent=73 // loop_exit
                  _
              $region74: #{tpu_custom_call.1} parent=51 // pred_fallthru
                _
              // Predicated region
              $region89: #{tpu_custom_call.1} parent=51 // pred_check
                _
              $region90: #{tpu_custom_call.1} parent=51 // pred_check_branch
                %703 = sbr.rel target = $region92
              $region91: #{tpu_custom_call.1} parent=51 // pred_region
                _
              $region92: #{tpu_custom_call.1} parent=51 // pred_fallthru
                _
            $region52: #{tpu_custom_call.1} parent=47 // pred_fallthru
              _
            // Predicated region
            $region53: #{tpu_custom_call.1} parent=47 // pred_check
              _
            $region54: #{tpu_custom_call.1} parent=47 // pred_check_branch
              %584 = sbr.rel target = $region56
            $region55: #{tpu_custom_call.1} parent=47 // pred_region
              %s586 = sdiv.u32.pop %s573, 7
              %s587 = srem.u32.pop %s573, 7
              // While loop
              $region57: #{tpu_custom_call.1} parent=55 // loop_pre_header
                _
              $region58: #{tpu_custom_call.1} parent=55 // loop_header
                %s589 = sphi 0, %s591
                %p590 = scmp.ge.s32.totalorder %s589, %s586
                %s594 = sphi 0, %s613
                %s595 = sphi %s566, %s616
                %s596 = sphi %s577, %s617
              $region59: #{tpu_custom_call.1} parent=55 // loop_header_branch
                %593 = sbr.rel (%p590) target = $region63
              $region60: #{tpu_custom_call.1} parent=55 // loop_body
                %v597 = vld [vmem:[%s595] sm:$0xff]
                %598 = vst [vmem:[%s596] sm:$0xff] %v597
                %v599 = vld [vmem:[%s595 + $0x8] sm:$0xff]
                %600 = vst [vmem:[%s596 + $0x8] sm:$0xff] %v599
                %v601 = vld [vmem:[%s595 + $0x10] sm:$0xff]
                %602 = vst [vmem:[%s596 + $0x10] sm:$0xff] %v601
                %v603 = vld [vmem:[%s595 + $0x18] sm:$0xff]
                %604 = vst [vmem:[%s596 + $0x18] sm:$0xff] %v603
                %v605 = vld [vmem:[%s595 + $0x20] sm:$0xff]
                %606 = vst [vmem:[%s596 + $0x20] sm:$0xff] %v605
                %v607 = vld [vmem:[%s595 + $0x28] sm:$0xff]
                %608 = vst [vmem:[%s596 + $0x28] sm:$0xff] %v607
                %v609 = vld [vmem:[%s595 + $0x30] sm:$0xff]
                %610 = vst [vmem:[%s596 + $0x30] sm:$0xff] %v609
                %s611 = sadd.s32 1, %s594
                %p612 = scmp.ge.s32.totalorder %s611, %s586
                %s613 = scalar_select %p612, 0, %s611
                %s614 = smul.u32 %s613, 56
                %s615 = smul.u32 %s613, 56
                %s616 = scalar_lea.vmem %s566, %s614 [#allocation2]
                %s617 = scalar_lea.vmem %s577, %s615
              $region61: #{tpu_custom_call.1} parent=55 // loop_footer
                %s591 = sadd.s32 %s589, 1
              $region62: #{tpu_custom_call.1} parent=55 // loop_footer_branch
                %588 = sbr.rel target = $region58
              $region63: #{tpu_custom_call.1} parent=55 // loop_exit
                _
              %s618 = sdiv.u32.pop %s573, 7
              %s619 = srem.u32.pop %s573, 7
              %s620 = smul.u32 %s618, 7
              %s621 = smul.u32 8, %s620
              %s622 = scalar_lea.vmem %s566, %s621 [#allocation2]
              %s623 = smul.u32 8, %s620
              %s624 = scalar_lea.vmem %s577, %s623
              // While loop
              $region64: #{tpu_custom_call.1} parent=55 // loop_pre_header
                _
              $region65: #{tpu_custom_call.1} parent=55 // loop_header
                %s626 = sphi 0, %s628
                %p627 = scmp.ge.s32.totalorder %s626, %s619
                %s631 = sphi 0, %s638
                %s632 = sphi %s622, %s641
                %s633 = sphi %s624, %s642
              $region66: #{tpu_custom_call.1} parent=55 // loop_header_branch
                %630 = sbr.rel (%p627) target = $region70
              $region67: #{tpu_custom_call.1} parent=55 // loop_body
                %v634 = vld [vmem:[%s632] sm:$0xff]
                %635 = vst [vmem:[%s633] sm:$0xff] %v634
                %s636 = sadd.s32 1, %s631
                %p637 = scmp.ge.s32.totalorder %s636, %s619
                %s638 = scalar_select %p637, 0, %s636
                %s639 = smul.u32 %s638, 8
                %s640 = smul.u32 %s638, 8
                %s641 = scalar_lea.vmem %s622, %s639 [#allocation2]
                %s642 = scalar_lea.vmem %s624, %s640
              $region68: #{tpu_custom_call.1} parent=55 // loop_footer
                %s628 = sadd.s32 %s626, 1
              $region69: #{tpu_custom_call.1} parent=55 // loop_footer_branch
                %625 = sbr.rel target = $region65
              $region70: #{tpu_custom_call.1} parent=55 // loop_exit
                _
            $region56: #{tpu_custom_call.1} parent=47 // pred_fallthru
              _
          $region48: #{tpu_custom_call.1} parent=43 // pred_fallthru
            _
          %704 = vnop
        $region44: #{tpu_custom_call.1} parent=39 // pred_fallthru
          _
      $region40: #{tpu_custom_call.1} parent=5 // pred_fallthru
        _
      %p705 = scmp.le.s32.totalorder 2, %s11
      // Predicated region
      $region93: #{tpu_custom_call.1} parent=5 // pred_check
        %p706 = pneg %p705
      $region94: #{tpu_custom_call.1} parent=5 // pred_check_branch
        %708 = sbr.rel (%p706) target = $region96
      $region95: #{tpu_custom_call.1} parent=5 // pred_region
        %s709 = ssub.s32 %s11, 2
        // Predicated region
        $region97: #{tpu_custom_call.1} parent=95 // pred_check
          %p710 = pneg %p150
        $region98: #{tpu_custom_call.1} parent=95 // pred_check_branch
          %712 = sbr.rel (%p710) target = $region100
        $region99: #{tpu_custom_call.1} parent=95 // pred_region
          %s713 = sand.u32 %s135, 1
          %s714 = sand.u32 %s135, 1
          %s715 = smul.addr %s714, 56
          %s716 = scalar_lea.vmem [#allocation2], %s715
        $region100: #{tpu_custom_call.1} parent=95 // pred_fallthru
          _
      $region96: #{tpu_custom_call.1} parent=5 // pred_fallthru
        _
    $region6: #{tpu_custom_call.1} parent=1 // loop_footer
      %s15 = sadd.s32 1, %s11
    $region7: #{tpu_custom_call.1} parent=1 // loop_footer_branch
      %10 = sbr.rel target = $region3
    $region8: #{tpu_custom_call.1} parent=1 // loop_exit
      _

</llo_original>
